<compile_context>
chip_gen: v5e
topology: v5e:2x2
jax: 0.10.0
libtpu: 0.0.40
codegen_flags: <defaults>
</compile_context>

<pallas_src>
import jax
import jax.numpy as jnp
from jax.experimental import pallas as pl
from jax.experimental.pallas import tpu as pltpu

NUM_CLASSES = 10      # `num_classes` is a free name in the PyTorch module; fixed here.
H1 = 128              # fc1 out features
H2 = 64               # fc2 out features
H2_PAD = 128          # lane-dense padded fc2 width
N_PAD = 128           # lane-dense padded output width
LANE = 128
SUBLANE_BF16 = 16     # bf16 packs two rows per sublane
DEFAULT_BLOCK_BATCH = 256


def _round_up(n, m):
    return ((n + m - 1) // m) * m


def mlp_kernel(x_ref, w1_ref, b1_ref, w2_ref, b2_ref, w3_ref, b3_ref, o_ref):
    # x tile: [TB, D_pad] bf16; weights bf16; biases f32; output f32.
    x = x_ref[...]
    h1 = jnp.dot(x, w1_ref[...], preferred_element_type=jnp.float32) + b1_ref[...]
    h1 = jnp.maximum(h1, 0.0).astype(jnp.bfloat16)          # f32 ReLU, bf16 for next MXU op
    h2 = jnp.dot(h1, w2_ref[...], preferred_element_type=jnp.float32) + b2_ref[...]
    h2 = jnp.maximum(h2, 0.0).astype(jnp.bfloat16)
    o_ref[...] = jnp.dot(h2, w3_ref[...], preferred_element_type=jnp.float32) + b3_ref[...]


def mlp_forward(x, params, *, block_batch=DEFAULT_BLOCK_BATCH):
    """x: [batch, ...] flattened to [batch, input_dim]; returns [batch, NUM_CLASSES] f32."""
    w1, b1, w2, b2, w3, b3 = params
    batch = x.shape[0]
    x2d = x.reshape(batch, -1)
    input_dim = x2d.shape[1]

    # Lane-dense / sublane-aligned padded sizes.
    d_pad = _round_up(input_dim, LANE)
    tb = min(block_batch, _round_up(batch, SUBLANE_BF16))   # bf16 sublane-packed batch tile
    b_pad = _round_up(batch, tb)

    # Zero-padding keeps the math identical: padded input features hit zero W1 rows,
    # padded H2 columns have zero weights+bias (ReLU(0)=0), padded output columns are
    # sliced off below.
    x_p = jnp.zeros((b_pad, d_pad), jnp.bfloat16).at[:batch, :input_dim].set(
        x2d.astype(jnp.bfloat16))
    w1_p = jnp.zeros((d_pad, H1), jnp.bfloat16).at[:input_dim, :].set(w1.astype(jnp.bfloat16))
    b1_p = b1.astype(jnp.float32).reshape(1, H1)
    w2_p = jnp.zeros((H1, H2_PAD), jnp.bfloat16).at[:, :H2].set(w2.astype(jnp.bfloat16))
    b2_p = jnp.zeros((1, H2_PAD), jnp.float32).at[:, :H2].set(
        b2.astype(jnp.float32).reshape(1, H2))
    w3_p = jnp.zeros((H2_PAD, N_PAD), jnp.bfloat16).at[:H2, :NUM_CLASSES].set(
        w3.astype(jnp.bfloat16))
    b3_p = jnp.zeros((1, N_PAD), jnp.float32).at[:, :NUM_CLASSES].set(
        b3.astype(jnp.float32).reshape(1, NUM_CLASSES))

    grid = (b_pad // tb,)
    out_padded = pl.pallas_call(
        mlp_kernel,
        out_shape=jax.ShapeDtypeStruct((b_pad, N_PAD), jnp.float32),
        grid=grid,
        in_specs=[
            pl.BlockSpec((tb, d_pad), lambda i: (i, 0)),      # x: streamed per batch tile
            pl.BlockSpec((d_pad, H1), lambda i: (0, 0)),      # w1: VMEM-resident
            pl.BlockSpec((1, H1), lambda i: (0, 0)),          # b1
            pl.BlockSpec((H1, H2_PAD), lambda i: (0, 0)),     # w2
            pl.BlockSpec((1, H2_PAD), lambda i: (0, 0)),      # b2
            pl.BlockSpec((H2_PAD, N_PAD), lambda i: (0, 0)),  # w3
            pl.BlockSpec((1, N_PAD), lambda i: (0, 0)),       # b3
        ],
        out_specs=pl.BlockSpec((tb, N_PAD), lambda i: (i, 0)),
        compiler_params=pltpu.CompilerParams(
            dimension_semantics=("parallel",)),
    )(x_p, w1_p, b1_p, w2_p, b2_p, w3_p, b3_p)

    return out_padded[:batch, :NUM_CLASSES]


def init_params(key, input_dim):
    """Deterministic init mimicking PyTorch Linear default (uniform +-1/sqrt(fan_in)).
    Weights stored [in_features, out_features] so kernel computes y = x @ W + b."""
    def linear(k, fan_in, fan_out):
        kw, kb = jax.random.split(k)
        bound = 1.0 / jnp.sqrt(fan_in)
        w = jax.random.uniform(kw, (fan_in, fan_out), jnp.float32, -bound, bound)
        b = jax.random.uniform(kb, (1, fan_out), jnp.float32, -bound, bound)
        return w, b

    k1, k2, k3 = jax.random.split(key, 3)
    w1, b1 = linear(k1, input_dim, H1)
    w2, b2 = linear(k2, H1, H2)
    w3, b3 = linear(k3, H2, NUM_CLASSES)
    return (w1, b1, w2, b2, w3, b3)


def reference_forward_f32(x, params):
    """Pure-f32 PyTorch-equivalent forward."""
    w1, b1, w2, b2, w3, b3 = params
    h = x.reshape(x.shape[0], -1).astype(jnp.float32)
    h = jnp.maximum(h @ w1 + b1, 0.0)
    h = jnp.maximum(h @ w2 + b2, 0.0)
    return h @ w3 + b3


def reference_forward_matched(x, params):
    """Same precision recipe as the kernel (bf16 operands, f32 accumulation)."""
    w1, b1, w2, b2, w3, b3 = params
    h = x.reshape(x.shape[0], -1).astype(jnp.bfloat16)
    h = jnp.dot(h, w1.astype(jnp.bfloat16), preferred_element_type=jnp.float32) + b1
    h = jnp.maximum(h, 0.0).astype(jnp.bfloat16)
    h = jnp.dot(h, w2.astype(jnp.bfloat16), preferred_element_type=jnp.float32) + b2
    h = jnp.maximum(h, 0.0).astype(jnp.bfloat16)
    return jnp.dot(h, w3.astype(jnp.bfloat16), preferred_element_type=jnp.float32) + b3


if __name__ == "__main__":
    key = jax.random.PRNGKey(0)
    kx, kp = jax.random.split(key)

    batch, input_dim = 2, 32
    x = jax.random.normal(kx, (batch, input_dim), jnp.float32)
    params = init_params(kp, input_dim)

    out = jax.jit(mlp_forward)(x, params)
    out = jax.block_until_ready(out)

    assert out.shape == (batch, NUM_CLASSES)
    # Tight check against a precision-matched (bf16 matmul, f32 accum) reference.
    ref_m = reference_forward_matched(x, params)
    assert jnp.allclose(out, ref_m, atol=2e-3, rtol=2e-3), (
        f"max diff vs matched ref: {float(jnp.max(jnp.abs(out - ref_m)))}")
    # Loose check against the pure-f32 PyTorch-equivalent forward.
    ref_f = reference_forward_f32(x, params)
    assert jnp.allclose(out, ref_f, atol=5e-2, rtol=5e-2), (
        f"max diff vs f32 ref: {float(jnp.max(jnp.abs(out - ref_f)))}")

    print("KERNEL_OK")
</pallas_src>

<mosaic_0001>
module attributes {stable_mosaic.version = 11 : i64} {
  func.func @mlp_kernel(%arg0: i32, %arg1: memref<16x128xbf16, #tpu.memory_space<vmem>>, %arg2: memref<128x128xbf16, #tpu.memory_space<vmem>>, %arg3: memref<1x128xf32, #tpu.memory_space<vmem>>, %arg4: memref<128x128xbf16, #tpu.memory_space<vmem>>, %arg5: memref<1x128xf32, #tpu.memory_space<vmem>>, %arg6: memref<128x128xbf16, #tpu.memory_space<vmem>>, %arg7: memref<1x128xf32, #tpu.memory_space<vmem>>, %arg8: memref<16x128xf32, #tpu.memory_space<vmem>>) attributes {dimension_semantics = [#tpu.dimension_semantics<parallel>], iteration_bounds = array<i64: 1>, scalar_prefetch = 0 : i64, scratch_operands = 0 : i64, tpu.core_type = #tpu.core_type<tc>, window_params = [{transform_indices = @transform_0, window_bounds = array<i64: 16, 128>}, {pipeline_mode = #tpu.pipeline_mode<synchronous>, transform_indices = @transform_1, window_bounds = array<i64: 128, 128>}, {pipeline_mode = #tpu.pipeline_mode<synchronous>, transform_indices = @transform_2, window_bounds = array<i64: 1, 128>}, {pipeline_mode = #tpu.pipeline_mode<synchronous>, transform_indices = @transform_3, window_bounds = array<i64: 128, 128>}, {pipeline_mode = #tpu.pipeline_mode<synchronous>, transform_indices = @transform_4, window_bounds = array<i64: 1, 128>}, {pipeline_mode = #tpu.pipeline_mode<synchronous>, transform_indices = @transform_5, window_bounds = array<i64: 128, 128>}, {pipeline_mode = #tpu.pipeline_mode<synchronous>, transform_indices = @transform_6, window_bounds = array<i64: 1, 128>}, {transform_indices = @transform_7, window_bounds = array<i64: 16, 128>}]} {
    %c0 = arith.constant 0 : index
    %c0_0 = arith.constant 0 : index
    %0 = vector.load %arg1[%c0, %c0_0] : memref<16x128xbf16, #tpu.memory_space<vmem>>, vector<16x128xbf16>
    %c0_1 = arith.constant 0 : index
    %c0_2 = arith.constant 0 : index
    %1 = vector.load %arg2[%c0_1, %c0_2] : memref<128x128xbf16, #tpu.memory_space<vmem>>, vector<128x128xbf16>
    %cst = arith.constant dense<0.000000e+00> : vector<16x128xf32>
    %2 = tpu.matmul %0, %1, %cst {dimension_numbers = #tpu.dot_dimension_numbers<[1], [0], [0], [1], [0, 0, 1, 1], [], []>} : vector<16x128xbf16>, vector<128x128xbf16>, vector<16x128xf32> -> vector<16x128xf32>
    %c0_3 = arith.constant 0 : index
    %c0_4 = arith.constant 0 : index
    %3 = vector.load %arg3[%c0_3, %c0_4] : memref<1x128xf32, #tpu.memory_space<vmem>>, vector<1x128xf32>
    %4 = vector.broadcast %3 : vector<1x128xf32> to vector<16x128xf32>
    %5 = arith.addf %2, %4 : vector<16x128xf32>
    %cst_5 = arith.constant 0.000000e+00 : f32
    %6 = vector.broadcast %cst_5 : f32 to vector<16x128xf32>
    %7 = arith.maximumf %5, %6 : vector<16x128xf32>
    %8 = arith.truncf %7 : vector<16x128xf32> to vector<16x128xbf16>
    %c0_6 = arith.constant 0 : index
    %c0_7 = arith.constant 0 : index
    %9 = vector.load %arg4[%c0_6, %c0_7] : memref<128x128xbf16, #tpu.memory_space<vmem>>, vector<128x128xbf16>
    %cst_8 = arith.constant dense<0.000000e+00> : vector<16x128xf32>
    %10 = tpu.matmul %8, %9, %cst_8 {dimension_numbers = #tpu.dot_dimension_numbers<[1], [0], [0], [1], [0, 0, 1, 1], [], []>} : vector<16x128xbf16>, vector<128x128xbf16>, vector<16x128xf32> -> vector<16x128xf32>
    %c0_9 = arith.constant 0 : index
    %c0_10 = arith.constant 0 : index
    %11 = vector.load %arg5[%c0_9, %c0_10] : memref<1x128xf32, #tpu.memory_space<vmem>>, vector<1x128xf32>
    %12 = vector.broadcast %11 : vector<1x128xf32> to vector<16x128xf32>
    %13 = arith.addf %10, %12 : vector<16x128xf32>
    %cst_11 = arith.constant 0.000000e+00 : f32
    %14 = vector.broadcast %cst_11 : f32 to vector<16x128xf32>
    %15 = arith.maximumf %13, %14 : vector<16x128xf32>
    %16 = arith.truncf %15 : vector<16x128xf32> to vector<16x128xbf16>
    %c0_12 = arith.constant 0 : index
    %c0_13 = arith.constant 0 : index
    %17 = vector.load %arg6[%c0_12, %c0_13] : memref<128x128xbf16, #tpu.memory_space<vmem>>, vector<128x128xbf16>
    %cst_14 = arith.constant dense<0.000000e+00> : vector<16x128xf32>
    %18 = tpu.matmul %16, %17, %cst_14 {dimension_numbers = #tpu.dot_dimension_numbers<[1], [0], [0], [1], [0, 0, 1, 1], [], []>} : vector<16x128xbf16>, vector<128x128xbf16>, vector<16x128xf32> -> vector<16x128xf32>
    %c0_15 = arith.constant 0 : index
    %c0_16 = arith.constant 0 : index
    %19 = vector.load %arg7[%c0_15, %c0_16] : memref<1x128xf32, #tpu.memory_space<vmem>>, vector<1x128xf32>
    %20 = vector.broadcast %19 : vector<1x128xf32> to vector<16x128xf32>
    %21 = arith.addf %18, %20 : vector<16x128xf32>
    %c0_17 = arith.constant 0 : index
    %c0_18 = arith.constant 0 : index
    %22 = vector.load %arg8[%c0_17, %c0_18] : memref<16x128xf32, #tpu.memory_space<vmem>>, vector<16x128xf32>
    tpu.vector_store %arg8[%c0_17, %c0_18], %21 {strides = array<i32>} : memref<16x128xf32, #tpu.memory_space<vmem>>, vector<16x128xf32>,
    return
  }
  func.func @transform_0(%arg0: i32) -> (i32, i32) {
    %c0_i32 = arith.constant 0 : i32
    %c0_i32_0 = arith.constant 0 : i32
    return %arg0, %c0_i32 : i32, i32
  }
  func.func @transform_1(%arg0: i32) -> (i32, i32) {
    %c0_i32 = arith.constant 0 : i32
    %c0_i32_0 = arith.constant 0 : i32
    %c0_i32_1 = arith.constant 0 : i32
    return %c0_i32, %c0_i32_0 : i32, i32
  }
  func.func @transform_2(%arg0: i32) -> (i32, i32) {
    %c0_i32 = arith.constant 0 : i32
    %c0_i32_0 = arith.constant 0 : i32
    %c0_i32_1 = arith.constant 0 : i32
    return %c0_i32, %c0_i32_0 : i32, i32
  }
  func.func @transform_3(%arg0: i32) -> (i32, i32) {
    %c0_i32 = arith.constant 0 : i32
    %c0_i32_0 = arith.constant 0 : i32
    %c0_i32_1 = arith.constant 0 : i32
    return %c0_i32, %c0_i32_0 : i32, i32
  }
  func.func @transform_4(%arg0: i32) -> (i32, i32) {
    %c0_i32 = arith.constant 0 : i32
    %c0_i32_0 = arith.constant 0 : i32
    %c0_i32_1 = arith.constant 0 : i32
    return %c0_i32, %c0_i32_0 : i32, i32
  }
  func.func @transform_5(%arg0: i32) -> (i32, i32) {
    %c0_i32 = arith.constant 0 : i32
    %c0_i32_0 = arith.constant 0 : i32
    %c0_i32_1 = arith.constant 0 : i32
    return %c0_i32, %c0_i32_0 : i32, i32
  }
  func.func @transform_6(%arg0: i32) -> (i32, i32) {
    %c0_i32 = arith.constant 0 : i32
    %c0_i32_0 = arith.constant 0 : i32
    %c0_i32_1 = arith.constant 0 : i32
    return %c0_i32, %c0_i32_0 : i32, i32
  }
  func.func @transform_7(%arg0: i32) -> (i32, i32) {
    %c0_i32 = arith.constant 0 : i32
    %c0_i32_0 = arith.constant 0 : i32
    return %arg0, %c0_i32 : i32, i32
  }
}

</mosaic_0001>

<llo_original>
// kernel: mlp_forward.1
$region0: #{mlp_forward.1}
  #allocation0 [shape = 'u32[]', space=smem, size = 0x4, offset = 0x4, fixed_abs, tag = 'smem constant byte address 0x4 - core index']
  #allocation1 [shape = 'u32[72,128]{1,0:T(1,128)}', space=vmem, size = 0x9000, scoped, tag = 'internal scratch']
  %s0 = inlined_call_operand.vmem [shape: bf16[16,128], index: 0, kind: input, shape index: {}]
  %s1 = inlined_call_operand.vmem [shape: bf16[128,128], index: 1, kind: input, shape index: {}]
  %s2 = inlined_call_operand.vmem [shape: f32[1,128], index: 2, kind: input, shape index: {}]
  %s3 = inlined_call_operand.vmem [shape: bf16[128,128], index: 3, kind: input, shape index: {}]
  %s4 = inlined_call_operand.vmem [shape: f32[1,128], index: 4, kind: input, shape index: {}]
  %s5 = inlined_call_operand.vmem [shape: bf16[128,128], index: 5, kind: input, shape index: {}]
  %s6 = inlined_call_operand.vmem [shape: f32[1,128], index: 6, kind: input, shape index: {}]
  %s7 = inlined_call_operand.vmem [shape: f32[16,128], index: 7, kind: output, shape index: {}]
  %s8 = sld [smem:[#allocation0]]
  $region38: #{mlp_forward.1} parent=0
    _
  %s10 = ssub.s32 1, %s8
  %s11 = scalar_select 0, %s10, %s8
  // Predicated region
  $region2: #{mlp_forward.1} parent=0 // pred_check
    _
  $region3: #{mlp_forward.1} parent=0 // pred_check_branch
    %13 = sbr.rel (0) target = $region5
  $region4: #{mlp_forward.1} parent=0 // pred_region
    _
  $region5: #{mlp_forward.1} parent=0 // pred_fallthru
    _
  // Predicated region
  $region6: #{mlp_forward.1} parent=0 // pred_check
    _
  $region7: #{mlp_forward.1} parent=0 // pred_check_branch
    %15 = sbr.rel (0) target = $region9
  $region8: #{mlp_forward.1} parent=0 // pred_region
    _
  $region9: #{mlp_forward.1} parent=0 // pred_fallthru
    _
  // Predicated region
  $region10: #{mlp_forward.1} parent=0 // pred_check
    _
  $region11: #{mlp_forward.1} parent=0 // pred_check_branch
    %17 = sbr.rel (0) target = $region13
  $region12: #{mlp_forward.1} parent=0 // pred_region
    _
  $region13: #{mlp_forward.1} parent=0 // pred_fallthru
    _
  // Predicated region
  $region14: #{mlp_forward.1} parent=0 // pred_check
    _
  $region15: #{mlp_forward.1} parent=0 // pred_check_branch
    %19 = sbr.rel (0) target = $region17
  $region16: #{mlp_forward.1} parent=0 // pred_region
    _
  $region17: #{mlp_forward.1} parent=0 // pred_fallthru
    _
  // Predicated region
  $region18: #{mlp_forward.1} parent=0 // pred_check
    _
  $region19: #{mlp_forward.1} parent=0 // pred_check_branch
    %21 = sbr.rel (0) target = $region21
  $region20: #{mlp_forward.1} parent=0 // pred_region
    _
  $region21: #{mlp_forward.1} parent=0 // pred_fallthru
    _
  // Predicated region
  $region22: #{mlp_forward.1} parent=0 // pred_check
    _
  $region23: #{mlp_forward.1} parent=0 // pred_check_branch
    %23 = sbr.rel (0) target = $region25
  $region24: #{mlp_forward.1} parent=0 // pred_region
    _
  $region25: #{mlp_forward.1} parent=0 // pred_fallthru
    _
  // Predicated region
  $region26: #{mlp_forward.1} parent=0 // pred_check
    _
  $region27: #{mlp_forward.1} parent=0 // pred_check_branch
    %25 = sbr.rel (0) target = $region29
  $region28: #{mlp_forward.1} parent=0 // pred_region
    _
  $region29: #{mlp_forward.1} parent=0 // pred_fallthru
    _
  %v26 = vld [vmem:[%s0] sm:$0xf]
  %v27 = vld [vmem:[%s0 + $0x4] sm:$0xf]
  %v28 = vld [vmem:[%s1] sm:$0xf]
  %v29 = vld [vmem:[%s1 + $0x4] sm:$0xf]
  %v30 = vld [vmem:[%s1 + $0x8] sm:$0xf]
  %v31 = vld [vmem:[%s1 + $0xc] sm:$0xf]
  %v32 = vld [vmem:[%s1 + $0x10] sm:$0xf]
  %v33 = vld [vmem:[%s1 + $0x14] sm:$0xf]
  %v34 = vld [vmem:[%s1 + $0x18] sm:$0xf]
  %v35 = vld [vmem:[%s1 + $0x1c] sm:$0xf]
  %v36 = vld [vmem:[%s1 + $0x20] sm:$0xf]
  %v37 = vld [vmem:[%s1 + $0x24] sm:$0xf]
  %v38 = vld [vmem:[%s1 + $0x28] sm:$0xf]
  %v39 = vld [vmem:[%s1 + $0x2c] sm:$0xf]
  %v40 = vld [vmem:[%s1 + $0x30] sm:$0xf]
  %v41 = vld [vmem:[%s1 + $0x34] sm:$0xf]
  %v42 = vld [vmem:[%s1 + $0x38] sm:$0xf]
  %v43 = vld [vmem:[%s1 + $0x3c] sm:$0xf]
  %v44 = vld [vmem:[%s2] sm:$0x1]
  %v46 = vperm.slane %v44, 0
  %v50 = vunpack.c.l.b16 %v26
  %v51 = vunpack.c.l.b16 %v27
  %v52 = vpack.c.b16 %v51, %v50
  %v70 = vunpack.c.l.b16 %v28
  %v71 = vunpack.c.l.b16 %v29
  %v72 = vunpack.c.l.b16 %v30
  %v73 = vunpack.c.l.b16 %v31
  %v74 = vunpack.c.l.b16 %v32
  %v75 = vunpack.c.l.b16 %v33
  %v76 = vunpack.c.l.b16 %v34
  %v77 = vunpack.c.l.b16 %v35
  %v78 = vunpack.c.l.b16 %v36
  %v79 = vunpack.c.l.b16 %v37
  %v80 = vunpack.c.l.b16 %v38
  %v81 = vunpack.c.l.b16 %v39
  %v82 = vunpack.c.l.b16 %v40
  %v83 = vunpack.c.l.b16 %v41
  %v84 = vunpack.c.l.b16 %v42
  %v85 = vunpack.c.l.b16 %v43
  %v86 = vpack.c.b16 %v71, %v70
  %v87 = vpack.c.b16 %v73, %v72
  %v88 = vpack.c.b16 %v75, %v74
  %v89 = vpack.c.b16 %v77, %v76
  %v90 = vpack.c.b16 %v79, %v78
  %v91 = vpack.c.b16 %v81, %v80
  %v92 = vpack.c.b16 %v83, %v82
  %v93 = vpack.c.b16 %v85, %v84
  %102 = vmatpush.bf16.msra.mxu0 %v93
  %103 = vmatpush.bf16.msra.mxu0 %v92
  %104 = vmatpush.bf16.msra.mxu0 %v91
  %105 = vmatpush.bf16.msra.mxu0 %v90
  %106 = vmatpush.bf16.msra.mxu0 %v89
  %107 = vmatpush.bf16.msra.mxu0 %v88
  %108 = vmatpush.bf16.msra.mxu0 %v87
  %109 = vmatpush.bf16.msra.mxu0 %v86
  %110 = vmatmul.bf16.gmra.mxu0 %v52
  %v111 = vpop.f32.mrf.mxu0
  %v112 = vadd.f32 %v46, %v111
  %v113 = vpop.f32.mrf.mxu0
  %v114 = vadd.f32 %v46, %v113
  %115 = vdwg.mxu0
  %v116 = vmax.f32 %v112, 0.0
  %v117 = vmax.f32 %v114, 0.0
  %v118 = vpack.c.bf16 %v117, %v116
  %v119 = vld [vmem:[%s3] sm:$0xf]
  %v120 = vld [vmem:[%s3 + $0x4] sm:$0xf]
  %v121 = vld [vmem:[%s3 + $0x8] sm:$0xf]
  %v122 = vld [vmem:[%s3 + $0xc] sm:$0xf]
  %v123 = vld [vmem:[%s3 + $0x10] sm:$0xf]
  %v124 = vld [vmem:[%s3 + $0x14] sm:$0xf]
  %v125 = vld [vmem:[%s3 + $0x18] sm:$0xf]
  %v126 = vld [vmem:[%s3 + $0x1c] sm:$0xf]
  %v127 = vld [vmem:[%s3 + $0x20] sm:$0xf]
  %v128 = vld [vmem:[%s3 + $0x24] sm:$0xf]
  %v129 = vld [vmem:[%s3 + $0x28] sm:$0xf]
  %v130 = vld [vmem:[%s3 + $0x2c] sm:$0xf]
  %v131 = vld [vmem:[%s3 + $0x30] sm:$0xf]
  %v132 = vld [vmem:[%s3 + $0x34] sm:$0xf]
  %v133 = vld [vmem:[%s3 + $0x38] sm:$0xf]
  %v134 = vld [vmem:[%s3 + $0x3c] sm:$0xf]
  %v135 = vld [vmem:[%s4] sm:$0x1]
  %v137 = vperm.slane %v135, 0
  %v155 = vunpack.c.l.b16 %v119
  %v156 = vunpack.c.l.b16 %v120
  %v157 = vunpack.c.l.b16 %v121
  %v158 = vunpack.c.l.b16 %v122
  %v159 = vunpack.c.l.b16 %v123
  %v160 = vunpack.c.l.b16 %v124
  %v161 = vunpack.c.l.b16 %v125
  %v162 = vunpack.c.l.b16 %v126
  %v163 = vunpack.c.l.b16 %v127
  %v164 = vunpack.c.l.b16 %v128
  %v165 = vunpack.c.l.b16 %v129
  %v166 = vunpack.c.l.b16 %v130
  %v167 = vunpack.c.l.b16 %v131
  %v168 = vunpack.c.l.b16 %v132
  %v169 = vunpack.c.l.b16 %v133
  %v170 = vunpack.c.l.b16 %v134
  %v171 = vpack.c.b16 %v156, %v155
  %v172 = vpack.c.b16 %v158, %v157
  %v173 = vpack.c.b16 %v160, %v159
  %v174 = vpack.c.b16 %v162, %v161
  %v175 = vpack.c.b16 %v164, %v163
  %v176 = vpack.c.b16 %v166, %v165
  %v177 = vpack.c.b16 %v168, %v167
  %v178 = vpack.c.b16 %v170, %v169
  %187 = vmatpush.bf16.msra.mxu0 %v178
  %188 = vmatpush.bf16.msra.mxu0 %v177
  %189 = vmatpush.bf16.msra.mxu0 %v176
  %190 = vmatpush.bf16.msra.mxu0 %v175
  %191 = vmatpush.bf16.msra.mxu0 %v174
  %192 = vmatpush.bf16.msra.mxu0 %v173
  %193 = vmatpush.bf16.msra.mxu0 %v172
  %194 = vmatpush.bf16.msra.mxu0 %v171
  %195 = vmatmul.bf16.gmra.mxu0 %v118
  %v196 = vpop.f32.mrf.mxu0
  %v197 = vadd.f32 %v137, %v196
  %v198 = vpop.f32.mrf.mxu0
  %v199 = vadd.f32 %v137, %v198
  %200 = vdwg.mxu0
  %v201 = vmax.f32 %v197, 0.0
  %v202 = vmax.f32 %v199, 0.0
  %v203 = vpack.c.bf16 %v202, %v201
  %v204 = vld [vmem:[%s5] sm:$0xf]
  %v205 = vld [vmem:[%s5 + $0x4] sm:$0xf]
  %v206 = vld [vmem:[%s5 + $0x8] sm:$0xf]
  %v207 = vld [vmem:[%s5 + $0xc] sm:$0xf]
  %v208 = vld [vmem:[%s5 + $0x10] sm:$0xf]
  %v209 = vld [vmem:[%s5 + $0x14] sm:$0xf]
  %v210 = vld [vmem:[%s5 + $0x18] sm:$0xf]
  %v211 = vld [vmem:[%s5 + $0x1c] sm:$0xf]
  %v212 = vld [vmem:[%s5 + $0x20] sm:$0xf]
  %v213 = vld [vmem:[%s5 + $0x24] sm:$0xf]
  %v214 = vld [vmem:[%s5 + $0x28] sm:$0xf]
  %v215 = vld [vmem:[%s5 + $0x2c] sm:$0xf]
  %v216 = vld [vmem:[%s5 + $0x30] sm:$0xf]
  %v217 = vld [vmem:[%s5 + $0x34] sm:$0xf]
  %v218 = vld [vmem:[%s5 + $0x38] sm:$0xf]
  %v219 = vld [vmem:[%s5 + $0x3c] sm:$0xf]
  %v220 = vld [vmem:[%s6] sm:$0x1]
  %v222 = vperm.slane %v220, 0
  %v240 = vunpack.c.l.b16 %v204
  %v241 = vunpack.c.l.b16 %v205
  %v242 = vunpack.c.l.b16 %v206
  %v243 = vunpack.c.l.b16 %v207
  %v244 = vunpack.c.l.b16 %v208
  %v245 = vunpack.c.l.b16 %v209
  %v246 = vunpack.c.l.b16 %v210
  %v247 = vunpack.c.l.b16 %v211
  %v248 = vunpack.c.l.b16 %v212
  %v249 = vunpack.c.l.b16 %v213
  %v250 = vunpack.c.l.b16 %v214
  %v251 = vunpack.c.l.b16 %v215
  %v252 = vunpack.c.l.b16 %v216
  %v253 = vunpack.c.l.b16 %v217
  %v254 = vunpack.c.l.b16 %v218
  %v255 = vunpack.c.l.b16 %v219
  %v256 = vpack.c.b16 %v241, %v240
  %v257 = vpack.c.b16 %v243, %v242
  %v258 = vpack.c.b16 %v245, %v244
  %v259 = vpack.c.b16 %v247, %v246
  %v260 = vpack.c.b16 %v249, %v248
  %v261 = vpack.c.b16 %v251, %v250
  %v262 = vpack.c.b16 %v253, %v252
  %v263 = vpack.c.b16 %v255, %v254
  %272 = vmatpush.bf16.msra.mxu0 %v263
  %273 = vmatpush.bf16.msra.mxu0 %v262
  %274 = vmatpush.bf16.msra.mxu0 %v261
  %275 = vmatpush.bf16.msra.mxu0 %v260
  %276 = vmatpush.bf16.msra.mxu0 %v259
  %277 = vmatpush.bf16.msra.mxu0 %v258
  %278 = vmatpush.bf16.msra.mxu0 %v257
  %279 = vmatpush.bf16.msra.mxu0 %v256
  %280 = vmatmul.bf16.gmra.mxu0 %v203
  %v281 = vpop.f32.mrf.mxu0
  %v282 = vadd.f32 %v222, %v281
  %v283 = vpop.f32.mrf.mxu0
  %v284 = vadd.f32 %v222, %v283
  %285 = vdwg.mxu0
  %286 = vst [vmem:[%s7] sm:$0xff] %v282
  %287 = vst [vmem:[%s7 + $0x8] sm:$0xff] %v284
  // Predicated region
  $region30: #{mlp_forward.1} parent=0 // pred_check
    _
  $region31: #{mlp_forward.1} parent=0 // pred_check_branch
    %289 = sbr.rel (0) target = $region33
  $region32: #{mlp_forward.1} parent=0 // pred_region
    _
  $region33: #{mlp_forward.1} parent=0 // pred_fallthru
    _
  // Predicated region
  $region34: #{mlp_forward.1} parent=0 // pred_check
    _
  $region35: #{mlp_forward.1} parent=0 // pred_check_branch
    %291 = sbr.rel (0) target = $region37
  $region36: #{mlp_forward.1} parent=0 // pred_region
    _
  $region37: #{mlp_forward.1} parent=0 // pred_fallthru
    _

</llo_original>
